<compile_context>
chip_gen: v7x
topology: tpu7x:2x2x1
jax: 0.10.0
libtpu: 0.0.40
codegen_flags: <defaults>
</compile_context>

<pallas_src>
import jax
import jax.numpy as jnp
from jax.experimental import pallas as pl
from jax.experimental.pallas import tpu as pltpu

EPS = 1e-5
TM_MAX = 2048          # rows per tile; ~5 MB double-buffered f32 z -> fits all gens.
VMEM_LIMIT = 32 << 20  # explicit scoped-VMEM budget (raises v5e's 16 MiB default).


def _round_up(x, m):
    return -(-x // m) * m


def affordance_kernel(z_ref, w1_ref, b1_ref, w2_ref, b2_ref, w3_ref, b3_ref,
                      o_ref):
    # z tile: [TM, 300] f32 in HBM/VMEM; cast to bf16 in-register right before
    # the MXU (avoids a separate wrapper-side cast/pad pass over HBM).
    z = z_ref[...].astype(jnp.bfloat16)

    # fc1 (+ folded bn1) + relu          (dropout = identity in eval mode)
    h = jnp.dot(z, w1_ref[...], preferred_element_type=jnp.float32)
    h = jnp.maximum(h + b1_ref[...], 0.0)                       # [TM, 128] f32

    # fc2 (+ folded bn2) + relu
    h = jnp.dot(h.astype(jnp.bfloat16), w2_ref[...],
                preferred_element_type=jnp.float32)
    h = jnp.maximum(h + b2_ref[...], 0.0)                       # [TM, 64] f32

    # fc3 + sigmoid: direct lane reduction (no transpose, no MXU push).
    logits = jnp.sum(h * w3_ref[...], axis=-1, keepdims=True)   # [TM, 1]
    logits = logits + b3_ref[...]
    o_ref[...] = jax.nn.sigmoid(logits)                         # [TM, 1] store


def _choose_tiling(M, tm_max):
    """Pick (tm, n_tiles, m_pad): balanced tiles, <8 padded rows per tile,
    even tile count when >1 so v7x megacore splits evenly."""
    if M <= tm_max:
        tm = max(8, _round_up(M, 8))
        n_tiles = 1
    else:
        n_tiles = -(-M // tm_max)
        if n_tiles % 2 == 1:
            n_tiles += 1                     # balance across 2 TCs on v7x
        tm = _round_up(-(-M // n_tiles), 8)  # balanced tile, 8-row aligned
    m_pad = tm * n_tiles
    return tm, n_tiles, m_pad


def affordance_classifier_forward(zs, params, *, tm_max=TM_MAX):
    """zs: [B, n_parts, num_classes, 300] -> [B, n_parts, num_classes, 1]."""
    B, P, C, D = zs.shape
    assert D == 300
    M = B * P * C

    # ---- Fold eval-mode BatchNorm into the linear layers (exact, host-side).
    s1 = params["g1"] * jax.lax.rsqrt(params["v1"] + EPS)                 # [1,128]
    w1f = (params["w1"] * s1).astype(jnp.bfloat16)                        # [300,128]
    b1f = ((params["b1"] - params["m1"]) * s1 + params["be1"]).astype(jnp.float32)
    s2 = params["g2"] * jax.lax.rsqrt(params["v2"] + EPS)                 # [1,64]
    w2f = (params["w2"] * s2).astype(jnp.bfloat16)                        # [128,64]
    b2f = ((params["b2"] - params["m2"]) * s2 + params["be2"]).astype(jnp.float32)
    w3t = params["w3"].reshape(1, -1).astype(jnp.float32)                 # [1,64]
    b3 = params["b3"].astype(jnp.float32)                                 # [1,1]

    # ---- Tile the row axis (balanced; padding only when unavoidable).
    tm, n_tiles, m_pad = _choose_tiling(M, tm_max)

    z2d = zs.reshape(M, D)                      # stays f32; cast happens in-kernel
    if m_pad != M:
        z2d = jnp.pad(z2d, ((0, m_pad - M), (0, 0)))

    def resident(a):
        # Whole array is one block, constant index_map -> stays in VMEM.
        return pl.BlockSpec(a.shape, lambda i: (0,) * a.ndim)

    out = pl.pallas_call(
        affordance_kernel,
        out_shape=jax.ShapeDtypeStruct((m_pad, 1), jnp.float32),
        grid=(n_tiles,),
        in_specs=[
            pl.BlockSpec((tm, D), lambda i: (i, 0)),   # z tiles, double-buffered
            resident(w1f), resident(b1f),
            resident(w2f), resident(b2f),
            resident(w3t), resident(b3),
        ],
        out_specs=pl.BlockSpec((tm, 1), lambda i: (i, 0)),
        compiler_params=pltpu.CompilerParams(
            dimension_semantics=("parallel",),   # megacore sharding on v7x
            vmem_limit_bytes=VMEM_LIMIT,
        ),
    )(z2d, w1f, b1f, w2f, b2f, w3t, b3)

    # Padded rows (if any) produce garbage and are sliced off here.
    return out[:M].reshape(B, P, C, 1)


def init_params(key):
    """Deterministic synthetic parameters matching the PyTorch module shapes.

    Linear weights are stored transposed ([in, out]) relative to PyTorch's
    [out, in] so the kernel can do row-major z @ W.
    """
    ks = jax.random.split(key, 8)

    def lin(kw, kb, fan_in, fan_out):
        bound = 1.0 / jnp.sqrt(fan_in)
        w = jax.random.uniform(kw, (fan_in, fan_out), jnp.float32, -bound, bound)
        b = jax.random.uniform(kb, (1, fan_out), jnp.float32, -bound, bound)
        return w, b

    w1, b1 = lin(ks[0], ks[1], 300, 128)
    w2, b2 = lin(ks[2], ks[3], 128, 64)
    w3, b3 = lin(ks[4], ks[5], 64, 1)

    # BatchNorm1d params / running stats (deterministic, non-trivial values).
    g1 = 1.0 + 0.1 * jax.random.normal(ks[6], (1, 128), jnp.float32)
    be1 = 0.05 * jax.random.normal(ks[7], (1, 128), jnp.float32)
    m1 = 0.01 * jnp.arange(128, dtype=jnp.float32).reshape(1, 128)
    v1 = 1.0 + 0.02 * jnp.arange(128, dtype=jnp.float32).reshape(1, 128)

    g2 = jnp.ones((1, 64), jnp.float32) * 0.9
    be2 = jnp.full((1, 64), 0.02, jnp.float32)
    m2 = 0.03 * jnp.arange(64, dtype=jnp.float32).reshape(1, 64)
    v2 = 1.0 + 0.05 * jnp.arange(64, dtype=jnp.float32).reshape(1, 64)

    return dict(w1=w1, b1=b1, g1=g1, be1=be1, m1=m1, v1=v1,
                w2=w2, b2=b2, g2=g2, be2=be2, m2=m2, v2=v2,
                w3=w3, b3=b3)


def reference_forward(zs, p):
    """Pure-JAX f32 reference mirroring the PyTorch per-(i,j) loop (eval mode)."""
    B, P, C, D = zs.shape
    z = zs.reshape(B * P * C, D)
    h = z @ p["w1"] + p["b1"]
    h = (h - p["m1"]) / jnp.sqrt(p["v1"] + EPS) * p["g1"] + p["be1"]
    h = jnp.maximum(h, 0.0)
    h = h @ p["w2"] + p["b2"]
    h = (h - p["m2"]) / jnp.sqrt(p["v2"] + EPS) * p["g2"] + p["be2"]
    h = jnp.maximum(h, 0.0)
    out = jax.nn.sigmoid(h @ p["w3"] + p["b3"])
    return out.reshape(B, P, C, 1)


if __name__ == "__main__":
    key = jax.random.PRNGKey(0)
    k_zs, k_par = jax.random.split(key)

    B, n_parts, num_classes = 2, 3, 4
    zs = jax.random.normal(k_zs, (B, n_parts, num_classes, 300), jnp.float32)
    params = init_params(k_par)

    pred = affordance_classifier_forward(zs, params)
    pred = jax.block_until_ready(pred)

    ref = reference_forward(zs, params)
    assert pred.shape == (B, n_parts, num_classes, 1)
    # bf16 matmul operands (f32 accumulation) -> relaxed tolerance vs f32 ref.
    assert jnp.allclose(pred, ref, atol=2e-2, rtol=2e-2)

    print("KERNEL_OK")
</pallas_src>

<mosaic_0001>
module attributes {stable_mosaic.version = 11 : i64} {
  func.func @affordance_kernel(%arg0: i32, %arg1: memref<24x300xf32, #tpu.memory_space<vmem>>, %arg2: memref<300x128xbf16, #tpu.memory_space<vmem>>, %arg3: memref<1x128xf32, #tpu.memory_space<vmem>>, %arg4: memref<128x64xbf16, #tpu.memory_space<vmem>>, %arg5: memref<1x64xf32, #tpu.memory_space<vmem>>, %arg6: memref<1x64xf32, #tpu.memory_space<vmem>>, %arg7: memref<1x1xf32, #tpu.memory_space<vmem>>, %arg8: memref<24x1xf32, #tpu.memory_space<vmem>>) attributes {dimension_semantics = [#tpu.dimension_semantics<parallel>], iteration_bounds = array<i64: 1>, scalar_prefetch = 0 : i64, scratch_operands = 0 : i64, tpu.core_type = #tpu.core_type<tc>, window_params = [{transform_indices = @transform_0, window_bounds = array<i64: 24, 300>}, {pipeline_mode = #tpu.pipeline_mode<synchronous>, transform_indices = @transform_1, window_bounds = array<i64: 300, 128>}, {pipeline_mode = #tpu.pipeline_mode<synchronous>, transform_indices = @transform_2, window_bounds = array<i64: 1, 128>}, {pipeline_mode = #tpu.pipeline_mode<synchronous>, transform_indices = @transform_3, window_bounds = array<i64: 128, 64>}, {pipeline_mode = #tpu.pipeline_mode<synchronous>, transform_indices = @transform_4, window_bounds = array<i64: 1, 64>}, {pipeline_mode = #tpu.pipeline_mode<synchronous>, transform_indices = @transform_5, window_bounds = array<i64: 1, 64>}, {pipeline_mode = #tpu.pipeline_mode<synchronous>, transform_indices = @transform_6, window_bounds = array<i64: 1, 1>}, {transform_indices = @transform_7, window_bounds = array<i64: 24, 1>}]} {
    %c0 = arith.constant 0 : index
    %c0_0 = arith.constant 0 : index
    %0 = vector.load %arg1[%c0, %c0_0] : memref<24x300xf32, #tpu.memory_space<vmem>>, vector<24x300xf32>
    %1 = arith.truncf %0 : vector<24x300xf32> to vector<24x300xbf16>
    %c0_1 = arith.constant 0 : index
    %c0_2 = arith.constant 0 : index
    %2 = vector.load %arg2[%c0_1, %c0_2] : memref<300x128xbf16, #tpu.memory_space<vmem>>, vector<300x128xbf16>
    %cst = arith.constant dense<0.000000e+00> : vector<24x128xf32>
    %3 = tpu.matmul %1, %2, %cst {dimension_numbers = #tpu.dot_dimension_numbers<[1], [0], [0], [1], [0, 0, 1, 1], [], []>} : vector<24x300xbf16>, vector<300x128xbf16>, vector<24x128xf32> -> vector<24x128xf32>
    %c0_3 = arith.constant 0 : index
    %c0_4 = arith.constant 0 : index
    %4 = vector.load %arg3[%c0_3, %c0_4] : memref<1x128xf32, #tpu.memory_space<vmem>>, vector<1x128xf32>
    %5 = vector.broadcast %4 : vector<1x128xf32> to vector<24x128xf32>
    %6 = arith.addf %3, %5 : vector<24x128xf32>
    %cst_5 = arith.constant 0.000000e+00 : f32
    %7 = vector.broadcast %cst_5 : f32 to vector<24x128xf32>
    %8 = arith.maximumf %6, %7 : vector<24x128xf32>
    %9 = arith.truncf %8 : vector<24x128xf32> to vector<24x128xbf16>
    %c0_6 = arith.constant 0 : index
    %c0_7 = arith.constant 0 : index
    %10 = vector.load %arg4[%c0_6, %c0_7] : memref<128x64xbf16, #tpu.memory_space<vmem>>, vector<128x64xbf16>
    %cst_8 = arith.constant dense<0.000000e+00> : vector<24x64xf32>
    %11 = tpu.matmul %9, %10, %cst_8 {dimension_numbers = #tpu.dot_dimension_numbers<[1], [0], [0], [1], [0, 0, 1, 1], [], []>} : vector<24x128xbf16>, vector<128x64xbf16>, vector<24x64xf32> -> vector<24x64xf32>
    %c0_9 = arith.constant 0 : index
    %c0_10 = arith.constant 0 : index
    %12 = vector.load %arg5[%c0_9, %c0_10] : memref<1x64xf32, #tpu.memory_space<vmem>>, vector<1x64xf32>
    %13 = vector.broadcast %12 : vector<1x64xf32> to vector<24x64xf32>
    %14 = arith.addf %11, %13 : vector<24x64xf32>
    %cst_11 = arith.constant 0.000000e+00 : f32
    %15 = vector.broadcast %cst_11 : f32 to vector<24x64xf32>
    %16 = arith.maximumf %14, %15 : vector<24x64xf32>
    %c0_12 = arith.constant 0 : index
    %c0_13 = arith.constant 0 : index
    %17 = vector.load %arg6[%c0_12, %c0_13] : memref<1x64xf32, #tpu.memory_space<vmem>>, vector<1x64xf32>
    %18 = vector.broadcast %17 : vector<1x64xf32> to vector<24x64xf32>
    %19 = arith.mulf %16, %18 : vector<24x64xf32>
    %cst_14 = arith.constant dense<0.000000e+00> : vector<24xf32>
    %20 = vector.multi_reduction <add>, %19, %cst_14 [1] : vector<24x64xf32> to vector<24xf32>
    %21 = vector.shape_cast %20 : vector<24xf32> to vector<24x1xf32>
    %c0_15 = arith.constant 0 : index
    %c0_16 = arith.constant 0 : index
    %22 = vector.load %arg7[%c0_15, %c0_16] : memref<1x1xf32, #tpu.memory_space<vmem>>, vector<1x1xf32>
    %23 = vector.broadcast %22 : vector<1x1xf32> to vector<24x1xf32>
    %24 = arith.addf %21, %23 : vector<24x1xf32>
    %25 = arith.negf %24 : vector<24x1xf32>
    %26 = math.exp %25 : vector<24x1xf32>
    %cst_17 = arith.constant 1.000000e+00 : f32
    %27 = vector.broadcast %cst_17 : f32 to vector<24x1xf32>
    %28 = arith.addf %27, %26 : vector<24x1xf32>
    %29 = arith.divf %27, %28 : vector<24x1xf32>
    %c0_18 = arith.constant 0 : index
    %c0_19 = arith.constant 0 : index
    %30 = vector.load %arg8[%c0_18, %c0_19] : memref<24x1xf32, #tpu.memory_space<vmem>>, vector<24x1xf32>
    tpu.vector_store %arg8[%c0_18, %c0_19], %29 {strides = array<i32>} : memref<24x1xf32, #tpu.memory_space<vmem>>, vector<24x1xf32>,
    return
  }
  func.func @transform_0(%arg0: i32) -> (i32, i32) {
    %c0_i32 = arith.constant 0 : i32
    %c0_i32_0 = arith.constant 0 : i32
    return %arg0, %c0_i32 : i32, i32
  }
  func.func @transform_1(%arg0: i32) -> (i32, i32) {
    %c0_i32 = arith.constant 0 : i32
    %c0_i32_0 = arith.constant 0 : i32
    %c0_i32_1 = arith.constant 0 : i32
    return %c0_i32, %c0_i32_0 : i32, i32
  }
  func.func @transform_2(%arg0: i32) -> (i32, i32) {
    %c0_i32 = arith.constant 0 : i32
    %c0_i32_0 = arith.constant 0 : i32
    %c0_i32_1 = arith.constant 0 : i32
    return %c0_i32, %c0_i32_0 : i32, i32
  }
  func.func @transform_3(%arg0: i32) -> (i32, i32) {
    %c0_i32 = arith.constant 0 : i32
    %c0_i32_0 = arith.constant 0 : i32
    %c0_i32_1 = arith.constant 0 : i32
    return %c0_i32, %c0_i32_0 : i32, i32
  }
  func.func @transform_4(%arg0: i32) -> (i32, i32) {
    %c0_i32 = arith.constant 0 : i32
    %c0_i32_0 = arith.constant 0 : i32
    %c0_i32_1 = arith.constant 0 : i32
    return %c0_i32, %c0_i32_0 : i32, i32
  }
  func.func @transform_5(%arg0: i32) -> (i32, i32) {
    %c0_i32 = arith.constant 0 : i32
    %c0_i32_0 = arith.constant 0 : i32
    %c0_i32_1 = arith.constant 0 : i32
    return %c0_i32, %c0_i32_0 : i32, i32
  }
  func.func @transform_6(%arg0: i32) -> (i32, i32) {
    %c0_i32 = arith.constant 0 : i32
    %c0_i32_0 = arith.constant 0 : i32
    %c0_i32_1 = arith.constant 0 : i32
    return %c0_i32, %c0_i32_0 : i32, i32
  }
  func.func @transform_7(%arg0: i32) -> (i32, i32) {
    %c0_i32 = arith.constant 0 : i32
    %c0_i32_0 = arith.constant 0 : i32
    return %arg0, %c0_i32 : i32, i32
  }
}

</mosaic_0001>

<llo_original>
// kernel: tpu_custom_call.1
$region0: #{tpu_custom_call.1}
  #allocation0 [shape = 'u32[]', space=smem, size = 0x4, offset = 0x4, fixed_abs, tag = 'smem constant byte address 0x4 - core index']
  #allocation1 [shape = 'u32[144,128]{1,0:T(1,128)}', space=vmem, size = 0x12000, scoped, tag = 'internal scratch']
  #allocation2 [shape = 'f32[1,1]{1,0:T(1,128)S(1)}', space=vmem, size = 0x200, scoped, tag = 'scoped memory for tpu_custom_call.1']
  %s0 = inlined_call_operand.vmem [shape: f32[24,300], index: 0, kind: input, shape index: {}]
  %s1 = inlined_call_operand.hbm [shape: bf16[300,128], index: 1, kind: input, shape index: {}]
  %s2 = inlined_call_operand.vmem [shape: f32[1,128], index: 2, kind: input, shape index: {}]
  %s3 = inlined_call_operand.vmem [shape: bf16[128,64], index: 3, kind: input, shape index: {}]
  %s4 = inlined_call_operand.vmem [shape: f32[1,64], index: 4, kind: input, shape index: {}]
  %s5 = inlined_call_operand.vmem [shape: f32[1,64], index: 5, kind: input, shape index: {}]
  %s6 = inlined_call_operand.<no memory space> [shape: f32[1,1], index: 6, kind: input, shape index: {}]
  %s7 = inlined_call_operand.vmem [shape: f32[24,1], index: 7, kind: output, shape index: {}]
  %s8 = sld [smem:[#allocation0]]
  $region42: #{tpu_custom_call.1} parent=0
    _
  %s10 = ssub.s32 1, %s8
  %s11 = scalar_select 0, %s10, %s8
  %v12 = vstv %s6
  %13 = vst [vmem:[#allocation2] sm:$0x1] %v12
  $region1: #{tpu_custom_call.1} parent=0
    #allocation3 [shape = 'u8[77824]{0}', space=vmem, size = 0x13000, scoped, tag = 'input window, operand 1, single buffered']
    #allocation4 [shape = 's32[1]{0}', space=sflag, size = 0x4, scoped, tag = 'scoped memory for tpu_custom_call.1']
    %14 = vsyncpa [#allocation4], 0
    // Predicated region
    $region2: #{tpu_custom_call.1} parent=1 // pred_check
      _
    $region3: #{tpu_custom_call.1} parent=1 // pred_check_branch
      %16 = sbr.rel (0) target = $region5
    $region4: #{tpu_custom_call.1} parent=1 // pred_region
      _
    $region5: #{tpu_custom_call.1} parent=1 // pred_fallthru
      _
    // Predicated region
    $region6: #{tpu_custom_call.1} parent=1 // pred_check
      _
    $region7: #{tpu_custom_call.1} parent=1 // pred_check_branch
      %18 = sbr.rel (0) target = $region9
    $region8: #{tpu_custom_call.1} parent=1 // pred_region
      %s20 = ssub.s32 2432, 2432
      %21 = vsyncadd [#allocation4], %s20
      %s22 = sshll.u32 [#allocation3], 4
      %s23 = int_to_ptr.vmem [resolvable:$true] %s22
      %28 = dma.hbm_to_vmem [thread:$0]  %s1, 2432, %s23, [#allocation4], 64, 64, 4
    $region9: #{tpu_custom_call.1} parent=1 // pred_fallthru
      _
    // Predicated region
    $region10: #{tpu_custom_call.1} parent=1 // pred_check
      _
    $region11: #{tpu_custom_call.1} parent=1 // pred_check_branch
      %30 = sbr.rel (0) target = $region13
    $region12: #{tpu_custom_call.1} parent=1 // pred_region
      _
    $region13: #{tpu_custom_call.1} parent=1 // pred_fallthru
      _
    // Predicated region
    $region14: #{tpu_custom_call.1} parent=1 // pred_check
      _
    $region15: #{tpu_custom_call.1} parent=1 // pred_check_branch
      %32 = sbr.rel (0) target = $region17
    $region16: #{tpu_custom_call.1} parent=1 // pred_region
      _
    $region17: #{tpu_custom_call.1} parent=1 // pred_fallthru
      _
    // Predicated region
    $region18: #{tpu_custom_call.1} parent=1 // pred_check
      _
    $region19: #{tpu_custom_call.1} parent=1 // pred_check_branch
      %34 = sbr.rel (0) target = $region21
    $region20: #{tpu_custom_call.1} parent=1 // pred_region
      _
    $region21: #{tpu_custom_call.1} parent=1 // pred_fallthru
      _
    // Predicated region
    $region22: #{tpu_custom_call.1} parent=1 // pred_check
      _
    $region23: #{tpu_custom_call.1} parent=1 // pred_check_branch
      %36 = sbr.rel (0) target = $region25
    $region24: #{tpu_custom_call.1} parent=1 // pred_region
      _
    $region25: #{tpu_custom_call.1} parent=1 // pred_fallthru
      _
    // Predicated region
    $region26: #{tpu_custom_call.1} parent=1 // pred_check
      _
    $region27: #{tpu_custom_call.1} parent=1 // pred_check_branch
      %38 = sbr.rel (0) target = $region29
    $region28: #{tpu_custom_call.1} parent=1 // pred_region
      _
    $region29: #{tpu_custom_call.1} parent=1 // pred_fallthru
      _
    // Predicated region
    $region30: #{tpu_custom_call.1} parent=1 // pred_check
      _
    $region31: #{tpu_custom_call.1} parent=1 // pred_check_branch
      %40 = sbr.rel (0) target = $region33
    $region32: #{tpu_custom_call.1} parent=1 // pred_region
      %41 = dma.done [#allocation4], 2432
    $region33: #{tpu_custom_call.1} parent=1 // pred_fallthru
      _
    %v43 = vld [vmem:[%s0] sm:$0xff]
    %v44 = vld [vmem:[%s0 + $0x8] sm:$0xff]
    %v45 = vld [vmem:[%s0 + $0x10] sm:$0xff]
    %v46 = vld [vmem:[%s0 + $0x18] sm:$0xff]
    %v47 = vld [vmem:[%s0 + $0x20] sm:$0xff]
    %v48 = vld [vmem:[%s0 + $0x28] sm:$0xff]
    %v49 = vld [vmem:[%s0 + $0x30] sm:$0xff]
    %v50 = vld [vmem:[%s0 + $0x38] sm:$0xff]
    %v51 = vld [vmem:[%s0 + $0x40] sm:$0xff]
    %v52 = vpack.c.bf16 %v46, %v43
    %v53 = vpack.c.bf16 %v47, %v44
    %v54 = vpack.c.bf16 %v48, %v45
    %v55 = vpack.c.bf16 %v49, %v49
    %v56 = vpack.c.bf16 %v50, %v50
    %v57 = vpack.c.bf16 %v51, %v51
    %v58 = vld [vmem:[#allocation3] sm:$0xf]
    %v59 = vld [vmem:[#allocation3 + $0x4] sm:$0xf]
    %v60 = vld [vmem:[#allocation3 + $0x8] sm:$0xf]
    %v61 = vld [vmem:[#allocation3 + $0xc] sm:$0xf]
    %v62 = vld [vmem:[#allocation3 + $0x10] sm:$0xf]
    %v63 = vld [vmem:[#allocation3 + $0x14] sm:$0xf]
    %v64 = vld [vmem:[#allocation3 + $0x18] sm:$0xf]
    %v65 = vld [vmem:[#allocation3 + $0x1c] sm:$0xf]
    %v66 = vld [vmem:[#allocation3 + $0x20] sm:$0xf]
    %v67 = vld [vmem:[#allocation3 + $0x24] sm:$0xf]
    %v68 = vld [vmem:[#allocation3 + $0x28] sm:$0xf]
    %v69 = vld [vmem:[#allocation3 + $0x2c] sm:$0xf]
    %v70 = vld [vmem:[#allocation3 + $0x30] sm:$0xf]
    %v71 = vld [vmem:[#allocation3 + $0x34] sm:$0xf]
    %v72 = vld [vmem:[#allocation3 + $0x38] sm:$0xf]
    %v73 = vld [vmem:[#allocation3 + $0x3c] sm:$0xf]
    %v74 = vld [vmem:[#allocation3 + $0x40] sm:$0xf]
    %v75 = vld [vmem:[#allocation3 + $0x44] sm:$0xf]
    %v76 = vld [vmem:[#allocation3 + $0x48] sm:$0xf]
    %v77 = vld [vmem:[#allocation3 + $0x4c] sm:$0xf]
    %v78 = vld [vmem:[#allocation3 + $0x50] sm:$0xf]
    %v79 = vld [vmem:[#allocation3 + $0x54] sm:$0xf]
    %v80 = vld [vmem:[#allocation3 + $0x58] sm:$0xf]
    %v81 = vld [vmem:[#allocation3 + $0x5c] sm:$0xf]
    %v82 = vld [vmem:[#allocation3 + $0x60] sm:$0xf]
    %v83 = vld [vmem:[#allocation3 + $0x64] sm:$0xf]
    %v84 = vld [vmem:[#allocation3 + $0x68] sm:$0xf]
    %v85 = vld [vmem:[#allocation3 + $0x6c] sm:$0xf]
    %v86 = vld [vmem:[#allocation3 + $0x70] sm:$0xf]
    %v87 = vld [vmem:[#allocation3 + $0x74] sm:$0xf]
    %v88 = vld [vmem:[#allocation3 + $0x78] sm:$0xf]
    %v89 = vld [vmem:[#allocation3 + $0x7c] sm:$0xf]
    %v90 = vld [vmem:[#allocation3 + $0x80] sm:$0xf]
    %v91 = vld [vmem:[#allocation3 + $0x84] sm:$0xf]
    %v92 = vld [vmem:[#allocation3 + $0x88] sm:$0xf]
    %v93 = vld [vmem:[#allocation3 + $0x8c] sm:$0xf]
    %v94 = vld [vmem:[#allocation3 + $0x90] sm:$0xf]
    %v95 = vld [vmem:[#allocation3 + $0x94] sm:$0x3]
    %v96 = vld [vmem:[%s2] sm:$0x1]
    %v98 = vlaneseq
    %v99 = vshrl.u32 %v98, 7
    %v100 = vsub.s32 0, %v99
    %v101 = vrot.slane %v96, %v100
    %v141 = vunpack.c.l.b16 %v58
    %v142 = vunpack.c.l.b16 %v59
    %v143 = vunpack.c.l.b16 %v60
    %v144 = vunpack.c.l.b16 %v61
    %v145 = vunpack.c.l.b16 %v62
    %v146 = vunpack.c.l.b16 %v63
    %v147 = vunpack.c.l.b16 %v64
    %v148 = vunpack.c.l.b16 %v65
    %v149 = vunpack.c.l.b16 %v66
    %v150 = vunpack.c.l.b16 %v67
    %v151 = vunpack.c.l.b16 %v68
    %v152 = vunpack.c.l.b16 %v69
    %v153 = vunpack.c.l.b16 %v70
    %v154 = vunpack.c.l.b16 %v71
    %v155 = vunpack.c.l.b16 %v72
    %v156 = vunpack.c.l.b16 %v73
    %v157 = vunpack.c.l.b16 %v74
    %v158 = vunpack.c.l.b16 %v75
    %v159 = vunpack.c.l.b16 %v76
    %v160 = vunpack.c.l.b16 %v77
    %v161 = vunpack.c.l.b16 %v78
    %v162 = vunpack.c.l.b16 %v79
    %v163 = vunpack.c.l.b16 %v80
    %v164 = vunpack.c.l.b16 %v81
    %v165 = vunpack.c.l.b16 %v82
    %v166 = vunpack.c.l.b16 %v83
    %v167 = vunpack.c.l.b16 %v84
    %v168 = vunpack.c.l.b16 %v85
    %v169 = vunpack.c.l.b16 %v86
    %v170 = vunpack.c.l.b16 %v87
    %v171 = vunpack.c.l.b16 %v88
    %v172 = vunpack.c.l.b16 %v89
    %v173 = vunpack.c.l.b16 %v90
    %v174 = vunpack.c.l.b16 %v91
    %v175 = vunpack.c.l.b16 %v92
    %v176 = vunpack.c.l.b16 %v93
    %v177 = vunpack.c.l.b16 %v94
    %v178 = vunpack.c.l.b16 %v95
    %v179 = vpack.c.b16 %v142, %v141
    %v180 = vpack.c.b16 %v144, %v143
    %v181 = vpack.c.b16 %v146, %v145
    %v182 = vpack.c.b16 %v148, %v147
    %v183 = vpack.c.b16 %v150, %v149
    %v184 = vpack.c.b16 %v152, %v151
    %v185 = vpack.c.b16 %v154, %v153
    %v186 = vpack.c.b16 %v156, %v155
    %v187 = vpack.c.b16 %v158, %v157
    %v188 = vpack.c.b16 %v160, %v159
    %v189 = vpack.c.b16 %v162, %v161
    %v190 = vpack.c.b16 %v164, %v163
    %v191 = vpack.c.b16 %v166, %v165
    %v192 = vpack.c.b16 %v168, %v167
    %v193 = vpack.c.b16 %v170, %v169
    %v194 = vpack.c.b16 %v172, %v171
    %v195 = vpack.c.b16 %v174, %v173
    %v196 = vpack.c.b16 %v176, %v175
    %v197 = vpack.c.b16 %v178, %v177
    %vm216 = vcmask 359424
    %v218 = vsel %vm216, %v54, 0
    %v221 = vsel %vm216, %v57, 0
    %vm223 = vcmask 1045504
    %v225 = vsel %vm223, %v197, 0
    %227 = vmatprep.subr.bf16.mxu0 0
    %228 = vmatpush1.bf16.msra.mxu0 %v179
    %229 = vmatprep.subr.bf16.mxu0 0
    %230 = vmatpush1.bf16.msra.mxu0 %v180
    %231 = vmatprep.subr.bf16.mxu0 0
    %232 = vmatpush1.bf16.msra.mxu0 %v181
    %233 = vmatprep.subr.bf16.mxu0 0
    %234 = vmatpush1.bf16.msra.mxu0 %v182
    %235 = vmatprep.subr.bf16.mxu0 0
    %236 = vmatpush1.bf16.msra.mxu0 %v183
    %237 = vmatprep.subr.bf16.mxu0 0
    %238 = vmatpush1.bf16.msra.mxu0 %v184
    %239 = vmatprep.subr.bf16.mxu0 0
    %240 = vmatpush1.bf16.msra.mxu0 %v185
    %241 = vmatprep.subr.bf16.mxu0 0
    %242 = vmatpush1.bf16.msra.mxu0 %v186
    %243 = vmatprep.subr.bf16.mxu0 0
    %244 = vmatpush1.bf16.msra.mxu0 %v187
    %245 = vmatprep.subr.bf16.mxu0 0
    %246 = vmatpush1.bf16.msra.mxu0 %v188
    %247 = vmatprep.subr.bf16.mxu0 0
    %248 = vmatpush1.bf16.msra.mxu0 %v189
    %249 = vmatprep.subr.bf16.mxu0 0
    %250 = vmatpush1.bf16.msra.mxu0 %v190
    %251 = vmatprep.subr.bf16.mxu0 0
    %252 = vmatpush1.bf16.msra.mxu0 %v191
    %253 = vmatprep.subr.bf16.mxu0 0
    %254 = vmatpush1.bf16.msra.mxu0 %v192
    %255 = vmatprep.subr.bf16.mxu0 0
    %256 = vmatpush1.bf16.msra.mxu0 %v193
    %257 = vmatprep.subr.bf16.mxu0 0
    %258 = vmatpush1.bf16.msra.mxu0 %v194
    %259 = vmatprep.mubr.bf16.mxu0 %v53
    %260 = vmatmul.mubr.bf16.gmra.mrb[0].mxu0 %v52
    %v261 = vpop.f32.mrb[0].mxu0
    %v262 = vadd.f32 %v101, %v261
    %v263 = vpop.f32.mrb[0].mxu0
    %v264 = vpop.f32.mrb[0].mxu0
    %v265 = vadd.f32 %v101, %v264
    %v266 = vpop.f32.mrb[0].mxu0
    %267 = vmatprep.mubr.bf16.mxu0 %v56
    %268 = vmatmul.mubr.bf16.gmra.mrb[0].mxu0 %v55
    %v269 = vpop.f32.mrb[0].mxu0
    %v270 = vadd.f32 %v101, %v269
    %v271 = vpop.f32.mrb[0].mxu0
    %v272 = vpop.f32.mrb[0].mxu0
    %v273 = vpop.f32.mrb[0].mxu0
    %274 = vdwg.mxu0
    %275 = vmatprep.subr.bf16.mxu0 0
    %276 = vmatpush1.bf16.msra.mxu0 %v195
    %277 = vmatprep.subr.bf16.mxu0 0
    %278 = vmatpush1.bf16.msra.mxu0 %v196
    %279 = vmatprep.subr.bf16.mxu0 0
    %280 = vmatpush1.bf16.msra.mxu0 %v225
    %281 = vmatprep.subr.bf16.mxu0 0
    %282 = vmatpush1.bf16.msra.mxu0 0
    %283 = vmatprep.subr.bf16.mxu0 0
    %284 = vmatpush1.bf16.msra.mxu0 0
    %285 = vmatprep.subr.bf16.mxu0 0
    %286 = vmatpush1.bf16.msra.mxu0 0
    %287 = vmatprep.subr.bf16.mxu0 0
    %288 = vmatpush1.bf16.msra.mxu0 0
    %289 = vmatprep.subr.bf16.mxu0 0
    %290 = vmatpush1.bf16.msra.mxu0 0
    %291 = vmatprep.subr.bf16.mxu0 0
    %292 = vmatpush1.bf16.msra.mxu0 0
    %293 = vmatprep.subr.bf16.mxu0 0
    %294 = vmatpush1.bf16.msra.mxu0 0
    %295 = vmatprep.subr.bf16.mxu0 0
    %296 = vmatpush1.bf16.msra.mxu0 0
    %297 = vmatprep.subr.bf16.mxu0 0
    %298 = vmatpush1.bf16.msra.mxu0 0
    %299 = vmatprep.subr.bf16.mxu0 0
    %300 = vmatpush1.bf16.msra.mxu0 0
    %301 = vmatprep.subr.bf16.mxu0 0
    %302 = vmatpush1.bf16.msra.mxu0 0
    %303 = vmatprep.subr.bf16.mxu0 0
    %304 = vmatpush1.bf16.msra.mxu0 0
    %305 = vmatprep.subr.bf16.mxu0 0
    %306 = vmatpush1.bf16.msra.mxu0 0
    %307 = vmatprep.mubr.bf16.mxu0 0
    %308 = vmatmul.mubr.bf16.gmra.mrb[0].mxu0 %v218
    %v309 = vpop.f32.mrb[0].mxu0
    %v310 = vadd.f32 %v262, %v309
    %v311 = vpop.f32.mrb[0].mxu0
    %v312 = vpop.f32.mrb[0].mxu0
    %v313 = vadd.f32 %v265, %v312
    %v314 = vpop.f32.mrb[0].mxu0
    %315 = vmatprep.mubr.bf16.mxu0 0
    %316 = vmatmul.mubr.bf16.gmra.mrb[0].mxu0 %v221
    %v317 = vpop.f32.mrb[0].mxu0
    %v318 = vadd.f32 %v270, %v317
    %v319 = vpop.f32.mrb[0].mxu0
    %v320 = vpop.f32.mrb[0].mxu0
    %v321 = vpop.f32.mrb[0].mxu0
    %322 = vdwg.mxu0
    %v323 = vmax.f32 %v310, 0.0
    %v324 = vmax.f32 %v313, 0.0
    %v325 = vmax.f32 %v318, 0.0
    %v326 = vpack.c.bf16 %v324, %v323
    %v327 = vpack.c.bf16 %v325, %v325
    %v328 = vld [vmem:[%s3] sm:$0xf]
    %v329 = vld [vmem:[%s3 + $0x4] sm:$0xf]
    %v330 = vld [vmem:[%s3 + $0x8] sm:$0xf]
    %v331 = vld [vmem:[%s3 + $0xc] sm:$0xf]
    %v332 = vld [vmem:[%s3 + $0x10] sm:$0xf]
    %v333 = vld [vmem:[%s3 + $0x14] sm:$0xf]
    %v334 = vld [vmem:[%s3 + $0x18] sm:$0xf]
    %v335 = vld [vmem:[%s3 + $0x1c] sm:$0xf]
    %v336 = vld [vmem:[%s3 + $0x20] sm:$0xf]
    %v337 = vld [vmem:[%s3 + $0x24] sm:$0xf]
    %v338 = vld [vmem:[%s3 + $0x28] sm:$0xf]
    %v339 = vld [vmem:[%s3 + $0x2c] sm:$0xf]
    %v340 = vld [vmem:[%s3 + $0x30] sm:$0xf]
    %v341 = vld [vmem:[%s3 + $0x34] sm:$0xf]
    %v342 = vld [vmem:[%s3 + $0x38] sm:$0xf]
    %v343 = vld [vmem:[%s3 + $0x3c] sm:$0xf]
    %v344 = vld [vmem:[%s4] sm:$0x1]
    %v346 = vlaneseq
    %v347 = vshrl.u32 %v346, 7
    %v348 = vsub.s32 0, %v347
    %v349 = vrot.slane %v344, %v348
    %v367 = vunpack.c.l.b16 %v328
    %v368 = vunpack.c.l.b16 %v329
    %v369 = vunpack.c.l.b16 %v330
    %v370 = vunpack.c.l.b16 %v331
    %v371 = vunpack.c.l.b16 %v332
    %v372 = vunpack.c.l.b16 %v333
    %v373 = vunpack.c.l.b16 %v334
    %v374 = vunpack.c.l.b16 %v335
    %v375 = vunpack.c.l.b16 %v336
    %v376 = vunpack.c.l.b16 %v337
    %v377 = vunpack.c.l.b16 %v338
    %v378 = vunpack.c.l.b16 %v339
    %v379 = vunpack.c.l.b16 %v340
    %v380 = vunpack.c.l.b16 %v341
    %v381 = vunpack.c.l.b16 %v342
    %v382 = vunpack.c.l.b16 %v343
    %v383 = vpack.c.b16 %v368, %v367
    %v384 = vpack.c.b16 %v370, %v369
    %v385 = vpack.c.b16 %v372, %v371
    %v386 = vpack.c.b16 %v374, %v373
    %v387 = vpack.c.b16 %v376, %v375
    %v388 = vpack.c.b16 %v378, %v377
    %v389 = vpack.c.b16 %v380, %v379
    %v390 = vpack.c.b16 %v382, %v381
    %399 = vmatprep.subr.bf16.mxu0 0
    %400 = vmatpush1.bf16.msra.mxu0 %v383
    %401 = vmatprep.subr.bf16.mxu0 0
    %402 = vmatpush1.bf16.msra.mxu0 %v384
    %403 = vmatprep.subr.bf16.mxu0 0
    %404 = vmatpush1.bf16.msra.mxu0 %v385
    %405 = vmatprep.subr.bf16.mxu0 0
    %406 = vmatpush1.bf16.msra.mxu0 %v386
    %407 = vmatprep.subr.bf16.mxu0 0
    %408 = vmatpush1.bf16.msra.mxu0 %v387
    %409 = vmatprep.subr.bf16.mxu0 0
    %410 = vmatpush1.bf16.msra.mxu0 %v388
    %411 = vmatprep.subr.bf16.mxu0 0
    %412 = vmatpush1.bf16.msra.mxu0 %v389
    %413 = vmatprep.subr.bf16.mxu0 0
    %414 = vmatpush1.bf16.msra.mxu0 %v390
    %415 = vmatprep.subr.bf16.mxu0 0
    %416 = vmatpush1.bf16.msra.mxu0 0
    %417 = vmatprep.subr.bf16.mxu0 0
    %418 = vmatpush1.bf16.msra.mxu0 0
    %419 = vmatprep.subr.bf16.mxu0 0
    %420 = vmatpush1.bf16.msra.mxu0 0
    %421 = vmatprep.subr.bf16.mxu0 0
    %422 = vmatpush1.bf16.msra.mxu0 0
    %423 = vmatprep.subr.bf16.mxu0 0
    %424 = vmatpush1.bf16.msra.mxu0 0
    %425 = vmatprep.subr.bf16.mxu0 0
    %426 = vmatpush1.bf16.msra.mxu0 0
    %427 = vmatprep.subr.bf16.mxu0 0
    %428 = vmatpush1.bf16.msra.mxu0 0
    %429 = vmatprep.subr.bf16.mxu0 0
    %430 = vmatpush1.bf16.msra.mxu0 0
    %431 = vmatprep.mubr.bf16.mxu0 0
    %432 = vmatmul.mubr.bf16.gmra.mrb[0].mxu0 %v326
    %v433 = vpop.f32.mrb[0].mxu0
    %v434 = vadd.f32 %v349, %v433
    %v435 = vpop.f32.mrb[0].mxu0
    %v436 = vpop.f32.mrb[0].mxu0
    %v437 = vadd.f32 %v349, %v436
    %v438 = vpop.f32.mrb[0].mxu0
    %439 = vmatprep.mubr.bf16.mxu0 0
    %440 = vmatmul.mubr.bf16.gmra.mrb[0].mxu0 %v327
    %v441 = vpop.f32.mrb[0].mxu0
    %v442 = vadd.f32 %v349, %v441
    %v443 = vpop.f32.mrb[0].mxu0
    %v444 = vpop.f32.mrb[0].mxu0
    %v445 = vpop.f32.mrb[0].mxu0
    %446 = vdwg.mxu0
    %v447 = vmax.f32 %v434, 0.0
    %v448 = vmax.f32 %v437, 0.0
    %v449 = vmax.f32 %v442, 0.0
    %v450 = vld [vmem:[%s5] sm:$0x1]
    %v452 = vlaneseq
    %v453 = vshrl.u32 %v452, 7
    %v454 = vsub.s32 0, %v453
    %v455 = vrot.slane %v450, %v454
    %v457 = vmul.f32 %v447, %v455
    %v458 = vmul.f32 %v448, %v455
    %v459 = vmul.f32 %v449, %v455
    %vm460 = vcmask 523264
    %v461 = vsel %vm460, %v457, 0.0
    %462 = vadd.xlane.f32.xlu0 %v461
    %v463 = vpop.xlane.xlu0 %462
    %v464 = vsel %vm460, %v458, 0.0
    %465 = vadd.xlane.f32.xlu0 %v464
    %v466 = vpop.xlane.xlu0 %465
    %v467 = vsel %vm460, %v459, 0.0
    %468 = vadd.xlane.f32.xlu0 %v467
    %v469 = vpop.xlane.xlu0 %468
    %v470 = vld [vmem:[#allocation2] sm:$0x1]
    %v472 = vlaneseq
    %v473 = vshrl.u32 %v472, 7
    %v474 = vsub.s32 0, %v473
    %v475 = vrot.slane %v470, %v474
    %v477 = vadd.f32 %v463, %v475
    %v478 = vadd.f32 %v466, %v475
    %v479 = vadd.f32 %v469, %v475
    %v480 = vxor.u32 %v477, 2147483648
    %v481 = vxor.u32 %v478, 2147483648
    %v482 = vxor.u32 %v479, 2147483648
    %v483 = vmul.f32 %v480, 1.442695
    %v484 = vpow.pop %v483
    %v485 = vmul.f32 %v481, 1.442695
    %v486 = vpow.pop %v485
    %v487 = vmul.f32 %v482, 1.442695
    %v488 = vpow.pop %v487
    %v489 = vadd.f32 %v484, 1.0
    %v490 = vadd.f32 %v486, 1.0
    %v491 = vadd.f32 %v488, 1.0
    %v492 = vrcp.pop %v489
    %v493 = vmul.f32 1.0, %v492
    %v494 = vrcp.pop %v490
    %v495 = vmul.f32 1.0, %v494
    %v496 = vrcp.pop %v491
    %v497 = vmul.f32 1.0, %v496
    %vm498 = vcmask 7168
    %499 = vst.msk [vmem:[%s7] sm:$0xff] %vm498, %v493
    %500 = vst.msk [vmem:[%s7 + $0x8] sm:$0xff] %vm498, %v495
    %501 = vst.msk [vmem:[%s7 + $0x10] sm:$0xff] %vm498, %v497
    // Predicated region
    $region34: #{tpu_custom_call.1} parent=1 // pred_check
      _
    $region35: #{tpu_custom_call.1} parent=1 // pred_check_branch
      %503 = sbr.rel (0) target = $region37
    $region36: #{tpu_custom_call.1} parent=1 // pred_region
      _
    $region37: #{tpu_custom_call.1} parent=1 // pred_fallthru
      _
    // Predicated region
    $region38: #{tpu_custom_call.1} parent=1 // pred_check
      _
    $region39: #{tpu_custom_call.1} parent=1 // pred_check_branch
      %505 = sbr.rel (0) target = $region41
    $region40: #{tpu_custom_call.1} parent=1 // pred_region
      _
    $region41: #{tpu_custom_call.1} parent=1 // pred_fallthru
      _
    %506 = vsyncpa [#allocation4], 1

</llo_original>
